<compile_context>
chip_gen: v6e
topology: v6e:2x2x1
jax: 0.10.0
libtpu: 0.0.40
codegen_flags: <defaults>
</compile_context>

<pallas_src>
import jax
import jax.numpy as jnp
from jax.experimental import pallas as pl
from jax.experimental.pallas import tpu as pltpu

HIDDEN = 1024   # fixed by the module definition
LANE = 128
SUBLANE = 8


def _round_up(x, m):
    return (x + m - 1) // m * m


def fc_kernel(x_ref, w1_ref, b1_ref, w2_ref, b2_ref, o_ref):
    # Layer 1: x @ W1 + b1, ReLU  (f32 accumulation on the MXU)
    h = jnp.dot(x_ref[...], w1_ref[...], preferred_element_type=jnp.float32)
    h = jnp.maximum(h + b1_ref[...], 0.0)          # b1 is (1, HIDDEN), broadcasts over rows
    # Layer 2: h @ W2 + b2 (cast h back to the weight dtype; no-op in the f32 path)
    y = jnp.dot(h.astype(w2_ref.dtype), w2_ref[...],
                preferred_element_type=jnp.float32)
    y = y + b2_ref[...]                            # b2 is (1, out_padded)
    # relu(y) - relu(y - 1) == clip(y, 0, 1) exactly for finite f32.
    o_ref[...] = jnp.minimum(jnp.maximum(y, 0.0), 1.0)


def fc_forward(x, w1, b1, w2, b2, *, tile_b=512, compute_dtype=None):
    """x: (B, in_features); w1: (in_features, HIDDEN); b1: (HIDDEN,);
    w2: (HIDDEN, out_features); b2: (out_features,). Returns (B, out_features) f32.

    compute_dtype=jnp.bfloat16 feeds the MXU bf16 inputs (f32 accumulation) for
    higher throughput / halved weight DMA; default None keeps exact f32 numerics.
    """
    B, in_f = x.shape
    out_f = w2.shape[1]

    # --- lane-dense output: pad out_features up to a multiple of 128 ---------
    out_p = _round_up(out_f, LANE)
    if out_p != out_f:
        w2 = jnp.pad(w2, ((0, 0), (0, out_p - out_f)))
        b2 = jnp.pad(b2, ((0, out_p - out_f),))

    # --- optional bf16 matmul inputs (accumulate in f32) ---------------------
    if compute_dtype is not None:
        x = x.astype(compute_dtype)
        w1 = w1.astype(compute_dtype)
        w2 = w2.astype(compute_dtype)
    itm = jnp.dtype(x.dtype).itemsize

    # --- batch tiling: TILE_B multiple of 8, pad B up to a multiple of it ----
    tile_b = max(SUBLANE, min(int(tile_b), _round_up(B, SUBLANE)))
    tile_b = _round_up(tile_b, SUBLANE)
    B_p = _round_up(B, tile_b)
    if B_p != B:
        x = jnp.pad(x, ((0, B_p - B), (0, 0)))

    b1_2d = b1.reshape(1, HIDDEN).astype(jnp.float32)
    b2_2d = b2.reshape(1, out_p).astype(jnp.float32)

    grid = (B_p // tile_b,)

    # VMEM budget: resident weights (double-buffer allocation), biases,
    # double-buffered x/out tiles, plus the f32 (tile_b, HIDDEN) intermediate.
    vmem_need = (2 * (in_f * HIDDEN + HIDDEN * out_p) * itm
                 + (HIDDEN + out_p) * 4
                 + 2 * tile_b * in_f * itm
                 + 2 * tile_b * out_p * 4
                 + tile_b * HIDDEN * 4)
    vmem_limit = int(min(max(2 * vmem_need, 16 * 1024 * 1024), 48 * 1024 * 1024))

    bytes_accessed = (x.size * itm + w1.size * itm + w2.size * itm
                      + b1_2d.size * 4 + b2_2d.size * 4 + B_p * out_p * 4)
    cost = pl.CostEstimate(
        flops=2 * B_p * (in_f * HIDDEN + HIDDEN * out_p),
        transcendentals=0,
        bytes_accessed=bytes_accessed)

    out = pl.pallas_call(
        fc_kernel,
        out_shape=jax.ShapeDtypeStruct((B_p, out_p), jnp.float32),
        grid_spec=pltpu.PrefetchScalarGridSpec(
            num_scalar_prefetch=0,
            grid=grid,
            in_specs=[
                pl.BlockSpec((tile_b, in_f), lambda i: (i, 0)),      # x tile, pipelined
                pl.BlockSpec((in_f, HIDDEN), lambda i: (0, 0)),      # W1 resident
                pl.BlockSpec((1, HIDDEN), lambda i: (0, 0)),         # b1 resident
                pl.BlockSpec((HIDDEN, out_p), lambda i: (0, 0)),     # W2 resident
                pl.BlockSpec((1, out_p), lambda i: (0, 0)),          # b2 resident
            ],
            out_specs=pl.BlockSpec((tile_b, out_p), lambda i: (i, 0)),
        ),
        compiler_params=pltpu.CompilerParams(
            dimension_semantics=("parallel",),   # batch tiles independent -> megacore on v7x
            vmem_limit_bytes=vmem_limit),
        cost_estimate=cost,
    )(x, w1, b1_2d, w2, b2_2d)

    # Strip batch / lane padding.
    return out[:B, :out_f]
    # TODO(synk): if in_features grows past ~2k, add a K grid axis ("arbitrary") with an
    # f32 VMEM accumulator + pl.when init/epilogue so W1 tiles stay within v7x's 64 MiB VMEM.


if __name__ == "__main__":
    # Small, deterministic example consistent with the module's forward.
    # B=12 deliberately exercises the batch-tail padding path.
    B, in_features, out_features = 12, 32, 16

    key = jax.random.PRNGKey(0)
    kx, kw1, kb1, kw2, kb2 = jax.random.split(key, 5)

    x = jax.random.normal(kx, (B, in_features), dtype=jnp.float32)
    # PyTorch nn.Linear stores weight as (out, in); we build directly in (in, out) layout.
    w1 = jax.random.normal(kw1, (in_features, HIDDEN), dtype=jnp.float32) * 0.05
    b1 = jax.random.normal(kb1, (HIDDEN,), dtype=jnp.float32) * 0.05
    w2 = jax.random.normal(kw2, (HIDDEN, out_features), dtype=jnp.float32) * 0.05
    b2 = jax.random.normal(kb2, (out_features,), dtype=jnp.float32) * 0.05

    out = fc_forward(x, w1, b1, w2, b2)
    jax.block_until_ready(out)

    # Pure-JAX reference check of the fused kernel.
    h_ref = jnp.maximum(x @ w1 + b1, 0.0)
    y_ref = h_ref @ w2 + b2
    ref = jnp.maximum(y_ref, 0.0) - jnp.maximum(y_ref - 1.0, 0.0)
    assert out.shape == (B, out_features)
    assert jnp.allclose(out, ref, atol=1e-4, rtol=1e-4)

    print("KERNEL_OK")
</pallas_src>

<mosaic_0001>
module attributes {stable_mosaic.version = 11 : i64} {
  func.func @fc_kernel(%arg0: i32, %arg1: memref<16x32xf32, #tpu.memory_space<vmem>>, %arg2: memref<32x1024xf32, #tpu.memory_space<vmem>>, %arg3: memref<1x1024xf32, #tpu.memory_space<vmem>>, %arg4: memref<1024x128xf32, #tpu.memory_space<vmem>>, %arg5: memref<1x128xf32, #tpu.memory_space<vmem>>, %arg6: memref<16x128xf32, #tpu.memory_space<vmem>>) attributes {dimension_semantics = [#tpu.dimension_semantics<parallel>], iteration_bounds = array<i64: 1>, scalar_prefetch = 0 : i64, scratch_operands = 0 : i64, tpu.core_type = #tpu.core_type<tc>, window_params = [{transform_indices = @transform_0, window_bounds = array<i64: 16, 32>}, {pipeline_mode = #tpu.pipeline_mode<synchronous>, transform_indices = @transform_1, window_bounds = array<i64: 32, 1024>}, {pipeline_mode = #tpu.pipeline_mode<synchronous>, transform_indices = @transform_2, window_bounds = array<i64: 1, 1024>}, {pipeline_mode = #tpu.pipeline_mode<synchronous>, transform_indices = @transform_3, window_bounds = array<i64: 1024, 128>}, {pipeline_mode = #tpu.pipeline_mode<synchronous>, transform_indices = @transform_4, window_bounds = array<i64: 1, 128>}, {transform_indices = @transform_5, window_bounds = array<i64: 16, 128>}]} {
    %c0 = arith.constant 0 : index
    %c0_0 = arith.constant 0 : index
    %0 = vector.load %arg1[%c0, %c0_0] : memref<16x32xf32, #tpu.memory_space<vmem>>, vector<16x32xf32>
    %c0_1 = arith.constant 0 : index
    %c0_2 = arith.constant 0 : index
    %1 = vector.load %arg2[%c0_1, %c0_2] : memref<32x1024xf32, #tpu.memory_space<vmem>>, vector<32x1024xf32>
    %cst = arith.constant dense<0.000000e+00> : vector<16x1024xf32>
    %2 = tpu.matmul %0, %1, %cst {dimension_numbers = #tpu.dot_dimension_numbers<[1], [0], [0], [1], [0, 0, 1, 1], [], []>} : vector<16x32xf32>, vector<32x1024xf32>, vector<16x1024xf32> -> vector<16x1024xf32>
    %c0_3 = arith.constant 0 : index
    %c0_4 = arith.constant 0 : index
    %3 = vector.load %arg3[%c0_3, %c0_4] : memref<1x1024xf32, #tpu.memory_space<vmem>>, vector<1x1024xf32>
    %4 = vector.broadcast %3 : vector<1x1024xf32> to vector<16x1024xf32>
    %5 = arith.addf %2, %4 : vector<16x1024xf32>
    %cst_5 = arith.constant 0.000000e+00 : f32
    %6 = vector.broadcast %cst_5 : f32 to vector<16x1024xf32>
    %7 = arith.maximumf %5, %6 : vector<16x1024xf32>
    %c0_6 = arith.constant 0 : index
    %c0_7 = arith.constant 0 : index
    %8 = vector.load %arg4[%c0_6, %c0_7] : memref<1024x128xf32, #tpu.memory_space<vmem>>, vector<1024x128xf32>
    %cst_8 = arith.constant dense<0.000000e+00> : vector<16x128xf32>
    %9 = tpu.matmul %7, %8, %cst_8 {dimension_numbers = #tpu.dot_dimension_numbers<[1], [0], [0], [1], [0, 0, 1, 1], [], []>} : vector<16x1024xf32>, vector<1024x128xf32>, vector<16x128xf32> -> vector<16x128xf32>
    %c0_9 = arith.constant 0 : index
    %c0_10 = arith.constant 0 : index
    %10 = vector.load %arg5[%c0_9, %c0_10] : memref<1x128xf32, #tpu.memory_space<vmem>>, vector<1x128xf32>
    %11 = vector.broadcast %10 : vector<1x128xf32> to vector<16x128xf32>
    %12 = arith.addf %9, %11 : vector<16x128xf32>
    %cst_11 = arith.constant 0.000000e+00 : f32
    %13 = vector.broadcast %cst_11 : f32 to vector<16x128xf32>
    %14 = arith.maximumf %12, %13 : vector<16x128xf32>
    %cst_12 = arith.constant 1.000000e+00 : f32
    %15 = vector.broadcast %cst_12 : f32 to vector<16x128xf32>
    %16 = arith.minimumf %14, %15 : vector<16x128xf32>
    %c0_13 = arith.constant 0 : index
    %c0_14 = arith.constant 0 : index
    %17 = vector.load %arg6[%c0_13, %c0_14] : memref<16x128xf32, #tpu.memory_space<vmem>>, vector<16x128xf32>
    tpu.vector_store %arg6[%c0_13, %c0_14], %16 {strides = array<i32>} : memref<16x128xf32, #tpu.memory_space<vmem>>, vector<16x128xf32>,
    return
  }
  func.func @transform_0(%arg0: i32) -> (i32, i32) {
    %c0_i32 = arith.constant 0 : i32
    %c0_i32_0 = arith.constant 0 : i32
    return %arg0, %c0_i32 : i32, i32
  }
  func.func @transform_1(%arg0: i32) -> (i32, i32) {
    %c0_i32 = arith.constant 0 : i32
    %c0_i32_0 = arith.constant 0 : i32
    %c0_i32_1 = arith.constant 0 : i32
    return %c0_i32, %c0_i32_0 : i32, i32
  }
  func.func @transform_2(%arg0: i32) -> (i32, i32) {
    %c0_i32 = arith.constant 0 : i32
    %c0_i32_0 = arith.constant 0 : i32
    %c0_i32_1 = arith.constant 0 : i32
    return %c0_i32, %c0_i32_0 : i32, i32
  }
  func.func @transform_3(%arg0: i32) -> (i32, i32) {
    %c0_i32 = arith.constant 0 : i32
    %c0_i32_0 = arith.constant 0 : i32
    %c0_i32_1 = arith.constant 0 : i32
    return %c0_i32, %c0_i32_0 : i32, i32
  }
  func.func @transform_4(%arg0: i32) -> (i32, i32) {
    %c0_i32 = arith.constant 0 : i32
    %c0_i32_0 = arith.constant 0 : i32
    %c0_i32_1 = arith.constant 0 : i32
    return %c0_i32, %c0_i32_0 : i32, i32
  }
  func.func @transform_5(%arg0: i32) -> (i32, i32) {
    %c0_i32 = arith.constant 0 : i32
    %c0_i32_0 = arith.constant 0 : i32
    return %arg0, %c0_i32 : i32, i32
  }
}

</mosaic_0001>

<llo_original>
// kernel: tpu_custom_call.1
$region0: #{tpu_custom_call.1}
  #allocation0 [shape = 'u32[]', space=smem, size = 0x4, offset = 0x4, fixed_abs, tag = 'smem constant byte address 0x4 - core index']
  #allocation1 [shape = 'u32[144,128]{1,0:T(1,128)}', space=vmem, size = 0x12000, scoped, tag = 'internal scratch']
  %s0 = inlined_call_operand.hbm [shape: f32[16,32], index: 0, kind: input, shape index: {}]
  %s1 = inlined_call_operand.hbm [shape: f32[32,1024], index: 1, kind: input, shape index: {}]
  %s2 = inlined_call_operand.hbm [shape: f32[1,1024], index: 2, kind: input, shape index: {}]
  %s3 = inlined_call_operand.hbm [shape: f32[1024,128], index: 3, kind: input, shape index: {}]
  %s4 = inlined_call_operand.vmem [shape: f32[1,128], index: 4, kind: input, shape index: {}]
  %s5 = inlined_call_operand.hbm [shape: f32[16,128], index: 5, kind: output, shape index: {}]
  %s6 = sld [smem:[#allocation0]]
  $region46: #{tpu_custom_call.1} parent=0
    _
  %s8 = ssub.s32 1, %s6
  %s9 = scalar_select 0, %s8, %s6
  $region1: #{tpu_custom_call.1} parent=0
    #allocation2 [shape = 'u8[8192]{0}', space=vmem, size = 0x2000, scoped, tag = 'input window, operand 0, single buffered']
    #allocation3 [shape = 's32[1]{0}', space=sflag, size = 0x4, scoped, tag = 'scoped memory for tpu_custom_call.1']
    #allocation4 [shape = 's32[1]{0}', space=sflag, size = 0x4, scoped, tag = 'scoped memory for tpu_custom_call.1']
    #allocation5 [shape = 'u8[131072]{0}', space=vmem, size = 0x20000, scoped, tag = 'input window, operand 1, single buffered']
    #allocation6 [shape = 's32[1]{0}', space=sflag, size = 0x4, scoped, tag = 'scoped memory for tpu_custom_call.1']
    #allocation7 [shape = 'u8[4096]{0}', space=vmem, size = 0x1000, scoped, tag = 'input window, operand 2, single buffered']
    #allocation8 [shape = 'u8[524288]{0}', space=vmem, size = 0x80000, scoped, tag = 'input window, operand 3, single buffered']
    #allocation9 [shape = 's32[1]{0}', space=sflag, size = 0x4, scoped, tag = 'scoped memory for tpu_custom_call.1']
    #allocation10 [shape = 'u8[8192]{0}', space=vmem, size = 0x2000, scoped, tag = 'output window, operand 0, single buffered']
    %10 = vsyncpa [#allocation3], 0
    %11 = vsyncpa [#allocation6], 0
    %12 = vsyncpa [#allocation9], 0
    %13 = vsyncpa [#allocation4], 0
    // Predicated region
    $region2: #{tpu_custom_call.1} parent=1 // pred_check
      _
    $region3: #{tpu_custom_call.1} parent=1 // pred_check_branch
      %15 = sbr.rel (0) target = $region5
    $region4: #{tpu_custom_call.1} parent=1 // pred_region
      %s17 = ssub.s32 256, 256
      %18 = vsyncadd [#allocation3], %s17
      %s19 = sshll.u32 [#allocation2], 4
      %s20 = int_to_ptr.vmem [resolvable:$true] %s19
      %25 = dma.hbm_to_vmem [thread:$0]  %s0, 256, %s20, [#allocation3], 128, 128, 8
    $region5: #{tpu_custom_call.1} parent=1 // pred_fallthru
      _
    // Predicated region
    $region6: #{tpu_custom_call.1} parent=1 // pred_check
      _
    $region7: #{tpu_custom_call.1} parent=1 // pred_check_branch
      %27 = sbr.rel (0) target = $region9
    $region8: #{tpu_custom_call.1} parent=1 // pred_region
      %s29 = ssub.s32 4096, 4096
      %30 = vsyncadd [#allocation6], %s29
      %s31 = sshll.u32 [#allocation5], 4
      %s32 = int_to_ptr.vmem [resolvable:$true] %s31
      %37 = dma.hbm_to_vmem [thread:$0]  %s1, 4096, %s32, [#allocation6], 1024, 1024, 64
    $region9: #{tpu_custom_call.1} parent=1 // pred_fallthru
      _
    // Predicated region
    $region10: #{tpu_custom_call.1} parent=1 // pred_check
      _
    $region11: #{tpu_custom_call.1} parent=1 // pred_check_branch
      %39 = sbr.rel (0) target = $region13
    $region12: #{tpu_custom_call.1} parent=1 // pred_region
      %s41 = ssub.s32 128, 128
      %42 = vsyncadd [#allocation6], %s41
      %s44 = sshll.u32 [#allocation7], 4
      %s45 = int_to_ptr.vmem [resolvable:$true] %s44
      %47 = dma.hbm_to_vmem [thread:$0]  %s2, 128, %s45, [#allocation6]
    $region13: #{tpu_custom_call.1} parent=1 // pred_fallthru
      _
    // Predicated region
    $region14: #{tpu_custom_call.1} parent=1 // pred_check
      _
    $region15: #{tpu_custom_call.1} parent=1 // pred_check_branch
      %49 = sbr.rel (0) target = $region17
    $region16: #{tpu_custom_call.1} parent=1 // pred_region
      %s51 = ssub.s32 16384, 16384
      %52 = vsyncadd [#allocation9], %s51
      %s53 = sshll.u32 [#allocation8], 4
      %s54 = int_to_ptr.vmem [resolvable:$true] %s53
      %59 = dma.hbm_to_vmem [thread:$0]  %s3, 16384, %s54, [#allocation9], 128, 128, 8
    $region17: #{tpu_custom_call.1} parent=1 // pred_fallthru
      _
    // Predicated region
    $region18: #{tpu_custom_call.1} parent=1 // pred_check
      _
    $region19: #{tpu_custom_call.1} parent=1 // pred_check_branch
      %61 = sbr.rel (0) target = $region21
    $region20: #{tpu_custom_call.1} parent=1 // pred_region
      _
    $region21: #{tpu_custom_call.1} parent=1 // pred_fallthru
      _
    // Predicated region
    $region22: #{tpu_custom_call.1} parent=1 // pred_check
      _
    $region23: #{tpu_custom_call.1} parent=1 // pred_check_branch
      %63 = sbr.rel (0) target = $region25
    $region24: #{tpu_custom_call.1} parent=1 // pred_region
      %64 = dma.done [#allocation3], 256
    $region25: #{tpu_custom_call.1} parent=1 // pred_fallthru
      _
    // Predicated region
    $region26: #{tpu_custom_call.1} parent=1 // pred_check
      _
    $region27: #{tpu_custom_call.1} parent=1 // pred_check_branch
      %66 = sbr.rel (0) target = $region29
    $region28: #{tpu_custom_call.1} parent=1 // pred_region
      %67 = dma.done [#allocation6], 4096
    $region29: #{tpu_custom_call.1} parent=1 // pred_fallthru
      _
    // Predicated region
    $region30: #{tpu_custom_call.1} parent=1 // pred_check
      _
    $region31: #{tpu_custom_call.1} parent=1 // pred_check_branch
      %69 = sbr.rel (0) target = $region33
    $region32: #{tpu_custom_call.1} parent=1 // pred_region
      %70 = dma.done [#allocation6], 128
    $region33: #{tpu_custom_call.1} parent=1 // pred_fallthru
      _
    // Predicated region
    $region34: #{tpu_custom_call.1} parent=1 // pred_check
      _
    $region35: #{tpu_custom_call.1} parent=1 // pred_check_branch
      %72 = sbr.rel (0) target = $region37
    $region36: #{tpu_custom_call.1} parent=1 // pred_region
      %73 = dma.done [#allocation9], 16384
    $region37: #{tpu_custom_call.1} parent=1 // pred_fallthru
      _
    %v74 = vld [vmem:[#allocation2] sm:$0xff]
    %v75 = vld [vmem:[#allocation2 + $0x8] sm:$0xff]
    %v76 = vld [vmem:[#allocation5] sm:$0xff]
    %v77 = vld [vmem:[#allocation5 + $0x8] sm:$0xff]
    %v78 = vld [vmem:[#allocation5 + $0x10] sm:$0xff]
    %v79 = vld [vmem:[#allocation5 + $0x18] sm:$0xff]
    %v80 = vld [vmem:[#allocation5 + $0x20] sm:$0xff]
    %v81 = vld [vmem:[#allocation5 + $0x28] sm:$0xff]
    %v82 = vld [vmem:[#allocation5 + $0x30] sm:$0xff]
    %v83 = vld [vmem:[#allocation5 + $0x38] sm:$0xff]
    %v84 = vld [vmem:[#allocation5 + $0x40] sm:$0xff]
    %v85 = vld [vmem:[#allocation5 + $0x48] sm:$0xff]
    %v86 = vld [vmem:[#allocation5 + $0x50] sm:$0xff]
    %v87 = vld [vmem:[#allocation5 + $0x58] sm:$0xff]
    %v88 = vld [vmem:[#allocation5 + $0x60] sm:$0xff]
    %v89 = vld [vmem:[#allocation5 + $0x68] sm:$0xff]
    %v90 = vld [vmem:[#allocation5 + $0x70] sm:$0xff]
    %v91 = vld [vmem:[#allocation5 + $0x78] sm:$0xff]
    %v92 = vld [vmem:[#allocation5 + $0x80] sm:$0xff]
    %v93 = vld [vmem:[#allocation5 + $0x88] sm:$0xff]
    %v94 = vld [vmem:[#allocation5 + $0x90] sm:$0xff]
    %v95 = vld [vmem:[#allocation5 + $0x98] sm:$0xff]
    %v96 = vld [vmem:[#allocation5 + $0xa0] sm:$0xff]
    %v97 = vld [vmem:[#allocation5 + $0xa8] sm:$0xff]
    %v98 = vld [vmem:[#allocation5 + $0xb0] sm:$0xff]
    %v99 = vld [vmem:[#allocation5 + $0xb8] sm:$0xff]
    %v100 = vld [vmem:[#allocation5 + $0xc0] sm:$0xff]
    %v101 = vld [vmem:[#allocation5 + $0xc8] sm:$0xff]
    %v102 = vld [vmem:[#allocation5 + $0xd0] sm:$0xff]
    %v103 = vld [vmem:[#allocation5 + $0xd8] sm:$0xff]
    %v104 = vld [vmem:[#allocation5 + $0xe0] sm:$0xff]
    %v105 = vld [vmem:[#allocation5 + $0xe8] sm:$0xff]
    %v106 = vld [vmem:[#allocation5 + $0xf0] sm:$0xff]
    %v107 = vld [vmem:[#allocation5 + $0xf8] sm:$0xff]
    %v108 = vld [vmem:[#allocation7] sm:$0xff]
    %v110 = vlaneseq
    %v111 = vshrl.u32 %v110, 7
    %v112 = vsub.s32 0, %v111
    %v113 = vrot.slane %v108, %v112
    %v114 = vlaneseq
    %v115 = vshrl.u32 %v114, 7
    %v116 = vsub.s32 1, %v115
    %v117 = vrot.slane %v108, %v116
    %v118 = vlaneseq
    %v119 = vshrl.u32 %v118, 7
    %v120 = vsub.s32 2, %v119
    %v121 = vrot.slane %v108, %v120
    %v122 = vlaneseq
    %v123 = vshrl.u32 %v122, 7
    %v124 = vsub.s32 3, %v123
    %v125 = vrot.slane %v108, %v124
    %v126 = vlaneseq
    %v127 = vshrl.u32 %v126, 7
    %v128 = vsub.s32 4, %v127
    %v129 = vrot.slane %v108, %v128
    %v130 = vlaneseq
    %v131 = vshrl.u32 %v130, 7
    %v132 = vsub.s32 5, %v131
    %v133 = vrot.slane %v108, %v132
    %v134 = vlaneseq
    %v135 = vshrl.u32 %v134, 7
    %v136 = vsub.s32 6, %v135
    %v137 = vrot.slane %v108, %v136
    %v138 = vlaneseq
    %v139 = vshrl.u32 %v138, 7
    %v140 = vsub.s32 7, %v139
    %v141 = vrot.slane %v108, %v140
    %vm150 = vcmask 261120
    %v152 = vsel %vm150, %v74, 0
    %v155 = vsel %vm150, %v75, 0
    %157 = vmatprep.subr.mxu0 0.0
    %158 = vmatpush1.msra.mxu0 0.0
    %159 = vmatprep.subr.mxu0 0.0
    %160 = vmatpush1.msra.mxu0 0.0
    %161 = vmatprep.subr.mxu0 0.0
    %162 = vmatpush1.msra.mxu0 0.0
    %163 = vmatprep.subr.mxu0 0.0
    %164 = vmatpush1.msra.mxu0 0.0
    %165 = vmatprep.subr.mxu0 0.0
    %166 = vmatpush1.msra.mxu0 0.0
    %167 = vmatprep.subr.mxu0 0.0
    %168 = vmatpush1.msra.mxu0 0.0
    %169 = vmatprep.subr.mxu0 0.0
    %170 = vmatpush1.msra.mxu0 0.0
    %171 = vmatprep.subr.mxu0 0.0
    %172 = vmatpush1.msra.mxu0 0.0
    %173 = vmatprep.subr.mxu0 0.0
    %174 = vmatpush1.msra.mxu0 0.0
    %175 = vmatprep.subr.mxu0 0.0
    %176 = vmatpush1.msra.mxu0 0.0
    %177 = vmatprep.subr.mxu0 0.0
    %178 = vmatpush1.msra.mxu0 0.0
    %179 = vmatprep.subr.mxu0 0.0
    %180 = vmatpush1.msra.mxu0 0.0
    %181 = vmatprep.subr.mxu0 %v101
    %182 = vmatpush1.msra.mxu0 %v100
    %183 = vmatprep.subr.mxu0 %v93
    %184 = vmatpush1.msra.mxu0 %v92
    %185 = vmatprep.subr.mxu0 %v85
    %186 = vmatpush1.msra.mxu0 %v84
    %187 = vmatprep.subr.mxu0 %v77
    %188 = vmatpush1.msra.mxu0 %v76
    %189 = vmatprep.subr.mxu0 0.0
    %190 = vmatpush2.msra.mxu0 0.0
    %191 = vmatprep.subr.mxu0 0.0
    %192 = vmatpush2.msra.mxu0 0.0
    %193 = vmatprep.subr.mxu0 0.0
    %194 = vmatpush2.msra.mxu0 0.0
    %195 = vmatprep.subr.mxu0 0.0
    %196 = vmatpush2.msra.mxu0 0.0
    %197 = vmatprep.subr.mxu0 0.0
    %198 = vmatpush2.msra.mxu0 0.0
    %199 = vmatprep.subr.mxu0 0.0
    %200 = vmatpush2.msra.mxu0 0.0
    %201 = vmatprep.subr.mxu0 0.0
    %202 = vmatpush2.msra.mxu0 0.0
    %203 = vmatprep.subr.mxu0 0.0
    %204 = vmatpush2.msra.mxu0 0.0
    %205 = vmatprep.subr.mxu0 0.0
    %206 = vmatpush2.msra.mxu0 0.0
    %207 = vmatprep.subr.mxu0 0.0
    %208 = vmatpush2.msra.mxu0 0.0
    %209 = vmatprep.subr.mxu0 0.0
    %210 = vmatpush2.msra.mxu0 0.0
    %211 = vmatprep.subr.mxu0 0.0
    %212 = vmatpush2.msra.mxu0 0.0
    %213 = vmatprep.subr.mxu0 0.0
    %214 = vmatpush2.msra.mxu0 0.0
    %215 = vmatprep.subr.mxu0 0.0
    %216 = vmatpush2.msra.mxu0 0.0
    %217 = vmatprep.subr.mxu0 0.0
    %218 = vmatpush2.msra.mxu0 0.0
    %219 = vmatprep.subr.mxu0 0.0
    %220 = vmatpush2.msra.mxu0 0.0
    %221 = vmatprep.mubr.f32.mxu0 0.0
    %222 = vmatmul.mubr.f32.gmra.mxu0 %v152
    %v223 = vpop.f32.mrf.mxu0
    %v224 = vadd.f32 %v113, %v223
    %v225 = vpop.f32.mrf.mxu0
    %v226 = vadd.f32 %v117, %v225
    %227 = vmatprep.mubr.f32.mxu0 0.0
    %228 = vmatmul.mubr.f32.gmra.mxu0 %v155
    %v229 = vpop.f32.mrf.mxu0
    %v230 = vadd.f32 %v113, %v229
    %v231 = vpop.f32.mrf.mxu0
    %v232 = vadd.f32 %v117, %v231
    %233 = vdwg.mxu0
    %234 = vmatprep.subr.mxu0 0.0
    %235 = vmatpush1.msra.mxu0 0.0
    %236 = vmatprep.subr.mxu0 0.0
    %237 = vmatpush1.msra.mxu0 0.0
    %238 = vmatprep.subr.mxu0 0.0
    %239 = vmatpush1.msra.mxu0 0.0
    %240 = vmatprep.subr.mxu0 0.0
    %241 = vmatpush1.msra.mxu0 0.0
    %242 = vmatprep.subr.mxu0 0.0
    %243 = vmatpush1.msra.mxu0 0.0
    %244 = vmatprep.subr.mxu0 0.0
    %245 = vmatpush1.msra.mxu0 0.0
    %246 = vmatprep.subr.mxu0 0.0
    %247 = vmatpush1.msra.mxu0 0.0
    %248 = vmatprep.subr.mxu0 0.0
    %249 = vmatpush1.msra.mxu0 0.0
    %250 = vmatprep.subr.mxu0 0.0
    %251 = vmatpush1.msra.mxu0 0.0
    %252 = vmatprep.subr.mxu0 0.0
    %253 = vmatpush1.msra.mxu0 0.0
    %254 = vmatprep.subr.mxu0 0.0
    %255 = vmatpush1.msra.mxu0 0.0
    %256 = vmatprep.subr.mxu0 0.0
    %257 = vmatpush1.msra.mxu0 0.0
    %258 = vmatprep.subr.mxu0 %v103
    %259 = vmatpush1.msra.mxu0 %v102
    %260 = vmatprep.subr.mxu0 %v95
    %261 = vmatpush1.msra.mxu0 %v94
    %262 = vmatprep.subr.mxu0 %v87
    %263 = vmatpush1.msra.mxu0 %v86
    %264 = vmatprep.subr.mxu0 %v79
    %265 = vmatpush1.msra.mxu0 %v78
    %266 = vmatprep.subr.mxu0 0.0
    %267 = vmatpush2.msra.mxu0 0.0
    %268 = vmatprep.subr.mxu0 0.0
    %269 = vmatpush2.msra.mxu0 0.0
    %270 = vmatprep.subr.mxu0 0.0
    %271 = vmatpush2.msra.mxu0 0.0
    %272 = vmatprep.subr.mxu0 0.0
    %273 = vmatpush2.msra.mxu0 0.0
    %274 = vmatprep.subr.mxu0 0.0
    %275 = vmatpush2.msra.mxu0 0.0
    %276 = vmatprep.subr.mxu0 0.0
    %277 = vmatpush2.msra.mxu0 0.0
    %278 = vmatprep.subr.mxu0 0.0
    %279 = vmatpush2.msra.mxu0 0.0
    %280 = vmatprep.subr.mxu0 0.0
    %281 = vmatpush2.msra.mxu0 0.0
    %282 = vmatprep.subr.mxu0 0.0
    %283 = vmatpush2.msra.mxu0 0.0
    %284 = vmatprep.subr.mxu0 0.0
    %285 = vmatpush2.msra.mxu0 0.0
    %286 = vmatprep.subr.mxu0 0.0
    %287 = vmatpush2.msra.mxu0 0.0
    %288 = vmatprep.subr.mxu0 0.0
    %289 = vmatpush2.msra.mxu0 0.0
    %290 = vmatprep.subr.mxu0 0.0
    %291 = vmatpush2.msra.mxu0 0.0
    %292 = vmatprep.subr.mxu0 0.0
    %293 = vmatpush2.msra.mxu0 0.0
    %294 = vmatprep.subr.mxu0 0.0
    %295 = vmatpush2.msra.mxu0 0.0
    %296 = vmatprep.subr.mxu0 0.0
    %297 = vmatpush2.msra.mxu0 0.0
    %298 = vmatprep.mubr.f32.mxu0 0.0
    %299 = vmatmul.mubr.f32.gmra.mxu0 %v152
    %v300 = vpop.f32.mrf.mxu0
    %v301 = vadd.f32 %v121, %v300
    %v302 = vpop.f32.mrf.mxu0
    %v303 = vadd.f32 %v125, %v302
    %304 = vmatprep.mubr.f32.mxu0 0.0
    %305 = vmatmul.mubr.f32.gmra.mxu0 %v155
    %v306 = vpop.f32.mrf.mxu0
    %v307 = vadd.f32 %v121, %v306
    %v308 = vpop.f32.mrf.mxu0
    %v309 = vadd.f32 %v125, %v308
    %310 = vdwg.mxu0
    %311 = vmatprep.subr.mxu0 0.0
    %312 = vmatpush1.msra.mxu0 0.0
    %313 = vmatprep.subr.mxu0 0.0
    %314 = vmatpush1.msra.mxu0 0.0
    %315 = vmatprep.subr.mxu0 0.0
    %316 = vmatpush1.msra.mxu0 0.0
    %317 = vmatprep.subr.mxu0 0.0
    %318 = vmatpush1.msra.mxu0 0.0
    %319 = vmatprep.subr.mxu0 0.0
    %320 = vmatpush1.msra.mxu0 0.0
    %321 = vmatprep.subr.mxu0 0.0
    %322 = vmatpush1.msra.mxu0 0.0
    %323 = vmatprep.subr.mxu0 0.0
    %324 = vmatpush1.msra.mxu0 0.0
    %325 = vmatprep.subr.mxu0 0.0
    %326 = vmatpush1.msra.mxu0 0.0
    %327 = vmatprep.subr.mxu0 0.0
    %328 = vmatpush1.msra.mxu0 0.0
    %329 = vmatprep.subr.mxu0 0.0
    %330 = vmatpush1.msra.mxu0 0.0
    %331 = vmatprep.subr.mxu0 0.0
    %332 = vmatpush1.msra.mxu0 0.0
    %333 = vmatprep.subr.mxu0 0.0
    %334 = vmatpush1.msra.mxu0 0.0
    %335 = vmatprep.subr.mxu0 %v105
    %336 = vmatpush1.msra.mxu0 %v104
    %337 = vmatprep.subr.mxu0 %v97
    %338 = vmatpush1.msra.mxu0 %v96
    %339 = vmatprep.subr.mxu0 %v89
    %340 = vmatpush1.msra.mxu0 %v88
    %341 = vmatprep.subr.mxu0 %v81
    %342 = vmatpush1.msra.mxu0 %v80
    %343 = vmatprep.subr.mxu0 0.0
    %344 = vmatpush2.msra.mxu0 0.0
    %345 = vmatprep.subr.mxu0 0.0
    %346 = vmatpush2.msra.mxu0 0.0
    %347 = vmatprep.subr.mxu0 0.0
    %348 = vmatpush2.msra.mxu0 0.0
    %349 = vmatprep.subr.mxu0 0.0
    %350 = vmatpush2.msra.mxu0 0.0
    %351 = vmatprep.subr.mxu0 0.0
    %352 = vmatpush2.msra.mxu0 0.0
    %353 = vmatprep.subr.mxu0 0.0
    %354 = vmatpush2.msra.mxu0 0.0
    %355 = vmatprep.subr.mxu0 0.0
    %356 = vmatpush2.msra.mxu0 0.0
    %357 = vmatprep.subr.mxu0 0.0
    %358 = vmatpush2.msra.mxu0 0.0
    %359 = vmatprep.subr.mxu0 0.0
    %360 = vmatpush2.msra.mxu0 0.0
    %361 = vmatprep.subr.mxu0 0.0
    %362 = vmatpush2.msra.mxu0 0.0
    %363 = vmatprep.subr.mxu0 0.0
    %364 = vmatpush2.msra.mxu0 0.0
    %365 = vmatprep.subr.mxu0 0.0
    %366 = vmatpush2.msra.mxu0 0.0
    %367 = vmatprep.subr.mxu0 0.0
    %368 = vmatpush2.msra.mxu0 0.0
    %369 = vmatprep.subr.mxu0 0.0
    %370 = vmatpush2.msra.mxu0 0.0
    %371 = vmatprep.subr.mxu0 0.0
    %372 = vmatpush2.msra.mxu0 0.0
    %373 = vmatprep.subr.mxu0 0.0
    %374 = vmatpush2.msra.mxu0 0.0
    %375 = vmatprep.mubr.f32.mxu0 0.0
    %376 = vmatmul.mubr.f32.gmra.mxu0 %v152
    %v377 = vpop.f32.mrf.mxu0
    %v378 = vadd.f32 %v129, %v377
    %v379 = vpop.f32.mrf.mxu0
    %v380 = vadd.f32 %v133, %v379
    %381 = vmatprep.mubr.f32.mxu0 0.0
    %382 = vmatmul.mubr.f32.gmra.mxu0 %v155
    %v383 = vpop.f32.mrf.mxu0
    %v384 = vadd.f32 %v129, %v383
    %v385 = vpop.f32.mrf.mxu0
    %v386 = vadd.f32 %v133, %v385
    %387 = vdwg.mxu0
    %388 = vmatprep.subr.mxu0 0.0
    %389 = vmatpush1.msra.mxu0 0.0
    %390 = vmatprep.subr.mxu0 0.0
    %391 = vmatpush1.msra.mxu0 0.0
    %392 = vmatprep.subr.mxu0 0.0
    %393 = vmatpush1.msra.mxu0 0.0
    %394 = vmatprep.subr.mxu0 0.0
    %395 = vmatpush1.msra.mxu0 0.0
    %396 = vmatprep.subr.mxu0 0.0
    %397 = vmatpush1.msra.mxu0 0.0
    %398 = vmatprep.subr.mxu0 0.0
    %399 = vmatpush1.msra.mxu0 0.0
    %400 = vmatprep.subr.mxu0 0.0
    %401 = vmatpush1.msra.mxu0 0.0
    %402 = vmatprep.subr.mxu0 0.0
    %403 = vmatpush1.msra.mxu0 0.0
    %404 = vmatprep.subr.mxu0 0.0
    %405 = vmatpush1.msra.mxu0 0.0
    %406 = vmatprep.subr.mxu0 0.0
    %407 = vmatpush1.msra.mxu0 0.0
    %408 = vmatprep.subr.mxu0 0.0
    %409 = vmatpush1.msra.mxu0 0.0
    %410 = vmatprep.subr.mxu0 0.0
    %411 = vmatpush1.msra.mxu0 0.0
    %412 = vmatprep.subr.mxu0 %v107
    %413 = vmatpush1.msra.mxu0 %v106
    %414 = vmatprep.subr.mxu0 %v99
    %415 = vmatpush1.msra.mxu0 %v98
    %416 = vmatprep.subr.mxu0 %v91
    %417 = vmatpush1.msra.mxu0 %v90
    %418 = vmatprep.subr.mxu0 %v83
    %419 = vmatpush1.msra.mxu0 %v82
    %420 = vmatprep.subr.mxu0 0.0
    %421 = vmatpush2.msra.mxu0 0.0
    %422 = vmatprep.subr.mxu0 0.0
    %423 = vmatpush2.msra.mxu0 0.0
    %424 = vmatprep.subr.mxu0 0.0
    %425 = vmatpush2.msra.mxu0 0.0
    %426 = vmatprep.subr.mxu0 0.0
    %427 = vmatpush2.msra.mxu0 0.0
    %428 = vmatprep.subr.mxu0 0.0
    %429 = vmatpush2.msra.mxu0 0.0
    %430 = vmatprep.subr.mxu0 0.0
    %431 = vmatpush2.msra.mxu0 0.0
    %432 = vmatprep.subr.mxu0 0.0
    %433 = vmatpush2.msra.mxu0 0.0
    %434 = vmatprep.subr.mxu0 0.0
    %435 = vmatpush2.msra.mxu0 0.0
    %436 = vmatprep.subr.mxu0 0.0
    %437 = vmatpush2.msra.mxu0 0.0
    %438 = vmatprep.subr.mxu0 0.0
    %439 = vmatpush2.msra.mxu0 0.0
    %440 = vmatprep.subr.mxu0 0.0
    %441 = vmatpush2.msra.mxu0 0.0
    %442 = vmatprep.subr.mxu0 0.0
    %443 = vmatpush2.msra.mxu0 0.0
    %444 = vmatprep.subr.mxu0 0.0
    %445 = vmatpush2.msra.mxu0 0.0
    %446 = vmatprep.subr.mxu0 0.0
    %447 = vmatpush2.msra.mxu0 0.0
    %448 = vmatprep.subr.mxu0 0.0
    %449 = vmatpush2.msra.mxu0 0.0
    %450 = vmatprep.subr.mxu0 0.0
    %451 = vmatpush2.msra.mxu0 0.0
    %452 = vmatprep.mubr.f32.mxu0 0.0
    %453 = vmatmul.mubr.f32.gmra.mxu0 %v152
    %v454 = vpop.f32.mrf.mxu0
    %v455 = vadd.f32 %v137, %v454
    %v456 = vpop.f32.mrf.mxu0
    %v457 = vadd.f32 %v141, %v456
    %458 = vmatprep.mubr.f32.mxu0 0.0
    %459 = vmatmul.mubr.f32.gmra.mxu0 %v155
    %v460 = vpop.f32.mrf.mxu0
    %v461 = vadd.f32 %v137, %v460
    %v462 = vpop.f32.mrf.mxu0
    %v463 = vadd.f32 %v141, %v462
    %464 = vdwg.mxu0
    %v465 = vmax.f32 %v224, 0.0
    %v466 = vmax.f32 %v226, 0.0
    %v467 = vmax.f32 %v301, 0.0
    %v468 = vmax.f32 %v303, 0.0
    %v469 = vmax.f32 %v378, 0.0
    %v470 = vmax.f32 %v380, 0.0
    %v471 = vmax.f32 %v455, 0.0
    %v472 = vmax.f32 %v457, 0.0
    %v473 = vmax.f32 %v230, 0.0
    %v474 = vmax.f32 %v232, 0.0
    %v475 = vmax.f32 %v307, 0.0
    %v476 = vmax.f32 %v309, 0.0
    %v477 = vmax.f32 %v384, 0.0
    %v478 = vmax.f32 %v386, 0.0
    %v479 = vmax.f32 %v461, 0.0
    %v480 = vmax.f32 %v463, 0.0
    %v481 = vld [vmem:[#allocation8] sm:$0xff]
    %v482 = vld [vmem:[#allocation8 + $0x8] sm:$0xff]
    %v483 = vld [vmem:[#allocation8 + $0x10] sm:$0xff]
    %v484 = vld [vmem:[#allocation8 + $0x18] sm:$0xff]
    %v485 = vld [vmem:[#allocation8 + $0x20] sm:$0xff]
    %v486 = vld [vmem:[#allocation8 + $0x28] sm:$0xff]
    %v487 = vld [vmem:[#allocation8 + $0x30] sm:$0xff]
    %v488 = vld [vmem:[#allocation8 + $0x38] sm:$0xff]
    %v489 = vld [vmem:[#allocation8 + $0x40] sm:$0xff]
    %v490 = vld [vmem:[#allocation8 + $0x48] sm:$0xff]
    %v491 = vld [vmem:[#allocation8 + $0x50] sm:$0xff]
    %v492 = vld [vmem:[#allocation8 + $0x58] sm:$0xff]
    %v493 = vld [vmem:[#allocation8 + $0x60] sm:$0xff]
    %v494 = vld [vmem:[#allocation8 + $0x68] sm:$0xff]
    %v495 = vld [vmem:[#allocation8 + $0x70] sm:$0xff]
    %v496 = vld [vmem:[#allocation8 + $0x78] sm:$0xff]
    %v497 = vld [vmem:[#allocation8 + $0x80] sm:$0xff]
    %v498 = vld [vmem:[#allocation8 + $0x88] sm:$0xff]
    %v499 = vld [vmem:[#allocation8 + $0x90] sm:$0xff]
    %v500 = vld [vmem:[#allocation8 + $0x98] sm:$0xff]
    %v501 = vld [vmem:[#allocation8 + $0xa0] sm:$0xff]
    %v502 = vld [vmem:[#allocation8 + $0xa8] sm:$0xff]
    %v503 = vld [vmem:[#allocation8 + $0xb0] sm:$0xff]
    %v504 = vld [vmem:[#allocation8 + $0xb8] sm:$0xff]
    %v505 = vld [vmem:[#allocation8 + $0xc0] sm:$0xff]
    %v506 = vld [vmem:[#allocation8 + $0xc8] sm:$0xff]
    %v507 = vld [vmem:[#allocation8 + $0xd0] sm:$0xff]
    %v508 = vld [vmem:[#allocation8 + $0xd8] sm:$0xff]
    %v509 = vld [vmem:[#allocation8 + $0xe0] sm:$0xff]
    %v510 = vld [vmem:[#allocation8 + $0xe8] sm:$0xff]
    %v511 = vld [vmem:[#allocation8 + $0xf0] sm:$0xff]
    %v512 = vld [vmem:[#allocation8 + $0xf8] sm:$0xff]
    %v513 = vld [vmem:[#allocation8 + $0x100] sm:$0xff]
    %v514 = vld [vmem:[#allocation8 + $0x108] sm:$0xff]
    %v515 = vld [vmem:[#allocation8 + $0x110] sm:$0xff]
    %v516 = vld [vmem:[#allocation8 + $0x118] sm:$0xff]
    %v517 = vld [vmem:[#allocation8 + $0x120] sm:$0xff]
    %v518 = vld [vmem:[#allocation8 + $0x128] sm:$0xff]
    %v519 = vld [vmem:[#allocation8 + $0x130] sm:$0xff]
    %v520 = vld [vmem:[#allocation8 + $0x138] sm:$0xff]
    %v521 = vld [vmem:[#allocation8 + $0x140] sm:$0xff]
    %v522 = vld [vmem:[#allocation8 + $0x148] sm:$0xff]
    %v523 = vld [vmem:[#allocation8 + $0x150] sm:$0xff]
    %v524 = vld [vmem:[#allocation8 + $0x158] sm:$0xff]
    %v525 = vld [vmem:[#allocation8 + $0x160] sm:$0xff]
    %v526 = vld [vmem:[#allocation8 + $0x168] sm:$0xff]
    %v527 = vld [vmem:[#allocation8 + $0x170] sm:$0xff]
    %v528 = vld [vmem:[#allocation8 + $0x178] sm:$0xff]
    %v529 = vld [vmem:[#allocation8 + $0x180] sm:$0xff]
    %v530 = vld [vmem:[#allocation8 + $0x188] sm:$0xff]
    %v531 = vld [vmem:[#allocation8 + $0x190] sm:$0xff]
    %v532 = vld [vmem:[#allocation8 + $0x198] sm:$0xff]
    %v533 = vld [vmem:[#allocation8 + $0x1a0] sm:$0xff]
    %v534 = vld [vmem:[#allocation8 + $0x1a8] sm:$0xff]
    %v535 = vld [vmem:[#allocation8 + $0x1b0] sm:$0xff]
    %v536 = vld [vmem:[#allocation8 + $0x1b8] sm:$0xff]
    %v537 = vld [vmem:[#allocation8 + $0x1c0] sm:$0xff]
    %v538 = vld [vmem:[#allocation8 + $0x1c8] sm:$0xff]
    %v539 = vld [vmem:[#allocation8 + $0x1d0] sm:$0xff]
    %v540 = vld [vmem:[#allocation8 + $0x1d8] sm:$0xff]
    %v541 = vld [vmem:[#allocation8 + $0x1e0] sm:$0xff]
    %v542 = vld [vmem:[#allocation8 + $0x1e8] sm:$0xff]
    %v543 = vld [vmem:[#allocation8 + $0x1f0] sm:$0xff]
    %v544 = vld [vmem:[#allocation8 + $0x1f8] sm:$0xff]
    %v545 = vld [vmem:[#allocation8 + $0x200] sm:$0xff]
    %v546 = vld [vmem:[#allocation8 + $0x208] sm:$0xff]
    %v547 = vld [vmem:[#allocation8 + $0x210] sm:$0xff]
    %v548 = vld [vmem:[#allocation8 + $0x218] sm:$0xff]
    %v549 = vld [vmem:[#allocation8 + $0x220] sm:$0xff]
    %v550 = vld [vmem:[#allocation8 + $0x228] sm:$0xff]
    %v551 = vld [vmem:[#allocation8 + $0x230] sm:$0xff]
    %v552 = vld [vmem:[#allocation8 + $0x238] sm:$0xff]
    %v553 = vld [vmem:[#allocation8 + $0x240] sm:$0xff]
    %v554 = vld [vmem:[#allocation8 + $0x248] sm:$0xff]
    %v555 = vld [vmem:[#allocation8 + $0x250] sm:$0xff]
    %v556 = vld [vmem:[#allocation8 + $0x258] sm:$0xff]
    %v557 = vld [vmem:[#allocation8 + $0x260] sm:$0xff]
    %v558 = vld [vmem:[#allocation8 + $0x268] sm:$0xff]
    %v559 = vld [vmem:[#allocation8 + $0x270] sm:$0xff]
    %v560 = vld [vmem:[#allocation8 + $0x278] sm:$0xff]
    %v561 = vld [vmem:[#allocation8 + $0x280] sm:$0xff]
    %v562 = vld [vmem:[#allocation8 + $0x288] sm:$0xff]
    %v563 = vld [vmem:[#allocation8 + $0x290] sm:$0xff]
    %v564 = vld [vmem:[#allocation8 + $0x298] sm:$0xff]
    %v565 = vld [vmem:[#allocation8 + $0x2a0] sm:$0xff]
    %v566 = vld [vmem:[#allocation8 + $0x2a8] sm:$0xff]
    %v567 = vld [vmem:[#allocation8 + $0x2b0] sm:$0xff]
    %v568 = vld [vmem:[#allocation8 + $0x2b8] sm:$0xff]
    %v569 = vld [vmem:[#allocation8 + $0x2c0] sm:$0xff]
    %v570 = vld [vmem:[#allocation8 + $0x2c8] sm:$0xff]
    %v571 = vld [vmem:[#allocation8 + $0x2d0] sm:$0xff]
    %v572 = vld [vmem:[#allocation8 + $0x2d8] sm:$0xff]
    %v573 = vld [vmem:[#allocation8 + $0x2e0] sm:$0xff]
    %v574 = vld [vmem:[#allocation8 + $0x2e8] sm:$0xff]
    %v575 = vld [vmem:[#allocation8 + $0x2f0] sm:$0xff]
    %v576 = vld [vmem:[#allocation8 + $0x2f8] sm:$0xff]
    %v577 = vld [vmem:[#allocation8 + $0x300] sm:$0xff]
    %v578 = vld [vmem:[#allocation8 + $0x308] sm:$0xff]
    %v579 = vld [vmem:[#allocation8 + $0x310] sm:$0xff]
    %v580 = vld [vmem:[#allocation8 + $0x318] sm:$0xff]
    %v581 = vld [vmem:[#allocation8 + $0x320] sm:$0xff]
    %v582 = vld [vmem:[#allocation8 + $0x328] sm:$0xff]
    %v583 = vld [vmem:[#allocation8 + $0x330] sm:$0xff]
    %v584 = vld [vmem:[#allocation8 + $0x338] sm:$0xff]
    %v585 = vld [vmem:[#allocation8 + $0x340] sm:$0xff]
    %v586 = vld [vmem:[#allocation8 + $0x348] sm:$0xff]
    %v587 = vld [vmem:[#allocation8 + $0x350] sm:$0xff]
    %v588 = vld [vmem:[#allocation8 + $0x358] sm:$0xff]
    %v589 = vld [vmem:[#allocation8 + $0x360] sm:$0xff]
    %v590 = vld [vmem:[#allocation8 + $0x368] sm:$0xff]
    %v591 = vld [vmem:[#allocation8 + $0x370] sm:$0xff]
    %v592 = vld [vmem:[#allocation8 + $0x378] sm:$0xff]
    %v593 = vld [vmem:[#allocation8 + $0x380] sm:$0xff]
    %v594 = vld [vmem:[#allocation8 + $0x388] sm:$0xff]
    %v595 = vld [vmem:[#allocation8 + $0x390] sm:$0xff]
    %v596 = vld [vmem:[#allocation8 + $0x398] sm:$0xff]
    %v597 = vld [vmem:[#allocation8 + $0x3a0] sm:$0xff]
    %v598 = vld [vmem:[#allocation8 + $0x3a8] sm:$0xff]
    %v599 = vld [vmem:[#allocation8 + $0x3b0] sm:$0xff]
    %v600 = vld [vmem:[#allocation8 + $0x3b8] sm:$0xff]
    %v601 = vld [vmem:[#allocation8 + $0x3c0] sm:$0xff]
    %v602 = vld [vmem:[#allocation8 + $0x3c8] sm:$0xff]
    %v603 = vld [vmem:[#allocation8 + $0x3d0] sm:$0xff]
    %v604 = vld [vmem:[#allocation8 + $0x3d8] sm:$0xff]
    %v605 = vld [vmem:[#allocation8 + $0x3e0] sm:$0xff]
    %v606 = vld [vmem:[#allocation8 + $0x3e8] sm:$0xff]
    %v607 = vld [vmem:[#allocation8 + $0x3f0] sm:$0xff]
    %v608 = vld [vmem:[#allocation8 + $0x3f8] sm:$0xff]
    %v609 = vld [vmem:[%s4] sm:$0x1]
    %v611 = vlaneseq
    %v612 = vshrl.u32 %v611, 7
    %v613 = vsub.s32 0, %v612
    %v614 = vrot.slane %v609, %v613
    %616 = vmatprep.subr.mxu0 0.0
    %617 = vmatpush1.msra.mxu0 %v496
    %618 = vmatprep.subr.mxu0 0.0
    %619 = vmatpush1.msra.mxu0 %v495
    %620 = vmatprep.subr.mxu0 0.0
    %621 = vmatpush1.msra.mxu0 %v494
    %622 = vmatprep.subr.mxu0 0.0
    %623 = vmatpush1.msra.mxu0 %v493
    %624 = vmatprep.subr.mxu0 0.0
    %625 = vmatpush1.msra.mxu0 %v492
    %626 = vmatprep.subr.mxu0 0.0
    %627 = vmatpush1.msra.mxu0 %v491
    %628 = vmatprep.subr.mxu0 0.0
    %629 = vmatpush1.msra.mxu0 %v490
    %630 = vmatprep.subr.mxu0 0.0
    %631 = vmatpush1.msra.mxu0 %v489
    %632 = vmatprep.subr.mxu0 0.0
    %633 = vmatpush1.msra.mxu0 %v488
    %634 = vmatprep.subr.mxu0 0.0
    %635 = vmatpush1.msra.mxu0 %v487
    %636 = vmatprep.subr.mxu0 0.0
    %637 = vmatpush1.msra.mxu0 %v486
    %638 = vmatprep.subr.mxu0 0.0
    %639 = vmatpush1.msra.mxu0 %v485
    %640 = vmatprep.subr.mxu0 0.0
    %641 = vmatpush1.msra.mxu0 %v484
    %642 = vmatprep.subr.mxu0 0.0
    %643 = vmatpush1.msra.mxu0 %v483
    %644 = vmatprep.subr.mxu0 0.0
    %645 = vmatpush1.msra.mxu0 %v482
    %646 = vmatprep.subr.mxu0 0.0
    %647 = vmatpush1.msra.mxu0 %v481
    %648 = vmatprep.subr.mxu0 0.0
    %649 = vmatpush2.msra.mxu0 %v512
    %650 = vmatprep.subr.mxu0 0.0
    %651 = vmatpush2.msra.mxu0 %v511
    %652 = vmatprep.subr.mxu0 0.0
    %653 = vmatpush2.msra.mxu0 %v510
    %654 = vmatprep.subr.mxu0 0.0
    %655 = vmatpush2.msra.mxu0 %v509
    %656 = vmatprep.subr.mxu0 0.0
    %657 = vmatpush2.msra.mxu0 %v508
    %658 = vmatprep.subr.mxu0 0.0
    %659 = vmatpush2.msra.mxu0 %v507
    %660 = vmatprep.subr.mxu0 0.0
    %661 = vmatpush2.msra.mxu0 %v506
    %662 = vmatprep.subr.mxu0 0.0
    %663 = vmatpush2.msra.mxu0 %v505
    %664 = vmatprep.subr.mxu0 0.0
    %665 = vmatpush2.msra.mxu0 %v504
    %666 = vmatprep.subr.mxu0 0.0
    %667 = vmatpush2.msra.mxu0 %v503
    %668 = vmatprep.subr.mxu0 0.0
    %669 = vmatpush2.msra.mxu0 %v502
    %670 = vmatprep.subr.mxu0 0.0
    %671 = vmatpush2.msra.mxu0 %v501
    %672 = vmatprep.subr.mxu0 0.0
    %673 = vmatpush2.msra.mxu0 %v500
    %674 = vmatprep.subr.mxu0 0.0
    %675 = vmatpush2.msra.mxu0 %v499
    %676 = vmatprep.subr.mxu0 0.0
    %677 = vmatpush2.msra.mxu0 %v498
    %678 = vmatprep.subr.mxu0 0.0
    %679 = vmatpush2.msra.mxu0 %v497
    %680 = vmatprep.mubr.f32.mxu0 %v466
    %681 = vmatmul.mubr.f32.gmra.mxu0 %v465
    %v682 = vpop.f32.mrf.mxu0
    %v683 = vadd.f32 %v614, %v682
    %v684 = vpop.f32.mrf.mxu0
    %685 = vmatprep.mubr.f32.mxu0 %v474
    %686 = vmatmul.mubr.f32.gmra.mxu0 %v473
    %v687 = vpop.f32.mrf.mxu0
    %v688 = vadd.f32 %v614, %v687
    %v689 = vpop.f32.mrf.mxu0
    %690 = vdwg.mxu0
    %691 = vmatprep.subr.mxu0 0.0
    %692 = vmatpush1.msra.mxu0 %v528
    %693 = vmatprep.subr.mxu0 0.0
    %694 = vmatpush1.msra.mxu0 %v527
    %695 = vmatprep.subr.mxu0 0.0
    %696 = vmatpush1.msra.mxu0 %v526
    %697 = vmatprep.subr.mxu0 0.0
    %698 = vmatpush1.msra.mxu0 %v525
    %699 = vmatprep.subr.mxu0 0.0
    %700 = vmatpush1.msra.mxu0 %v524
    %701 = vmatprep.subr.mxu0 0.0
    %702 = vmatpush1.msra.mxu0 %v523
    %703 = vmatprep.subr.mxu0 0.0
    %704 = vmatpush1.msra.mxu0 %v522
    %705 = vmatprep.subr.mxu0 0.0
    %706 = vmatpush1.msra.mxu0 %v521
    %707 = vmatprep.subr.mxu0 0.0
    %708 = vmatpush1.msra.mxu0 %v520
    %709 = vmatprep.subr.mxu0 0.0
    %710 = vmatpush1.msra.mxu0 %v519
    %711 = vmatprep.subr.mxu0 0.0
    %712 = vmatpush1.msra.mxu0 %v518
    %713 = vmatprep.subr.mxu0 0.0
    %714 = vmatpush1.msra.mxu0 %v517
    %715 = vmatprep.subr.mxu0 0.0
    %716 = vmatpush1.msra.mxu0 %v516
    %717 = vmatprep.subr.mxu0 0.0
    %718 = vmatpush1.msra.mxu0 %v515
    %719 = vmatprep.subr.mxu0 0.0
    %720 = vmatpush1.msra.mxu0 %v514
    %721 = vmatprep.subr.mxu0 0.0
    %722 = vmatpush1.msra.mxu0 %v513
    %723 = vmatprep.subr.mxu0 0.0
    %724 = vmatpush2.msra.mxu0 %v544
    %725 = vmatprep.subr.mxu0 0.0
    %726 = vmatpush2.msra.mxu0 %v543
    %727 = vmatprep.subr.mxu0 0.0
    %728 = vmatpush2.msra.mxu0 %v542
    %729 = vmatprep.subr.mxu0 0.0
    %730 = vmatpush2.msra.mxu0 %v541
    %731 = vmatprep.subr.mxu0 0.0
    %732 = vmatpush2.msra.mxu0 %v540
    %733 = vmatprep.subr.mxu0 0.0
    %734 = vmatpush2.msra.mxu0 %v539
    %735 = vmatprep.subr.mxu0 0.0
    %736 = vmatpush2.msra.mxu0 %v538
    %737 = vmatprep.subr.mxu0 0.0
    %738 = vmatpush2.msra.mxu0 %v537
    %739 = vmatprep.subr.mxu0 0.0
    %740 = vmatpush2.msra.mxu0 %v536
    %741 = vmatprep.subr.mxu0 0.0
    %742 = vmatpush2.msra.mxu0 %v535
    %743 = vmatprep.subr.mxu0 0.0
    %744 = vmatpush2.msra.mxu0 %v534
    %745 = vmatprep.subr.mxu0 0.0
    %746 = vmatpush2.msra.mxu0 %v533
    %747 = vmatprep.subr.mxu0 0.0
    %748 = vmatpush2.msra.mxu0 %v532
    %749 = vmatprep.subr.mxu0 0.0
    %750 = vmatpush2.msra.mxu0 %v531
    %751 = vmatprep.subr.mxu0 0.0
    %752 = vmatpush2.msra.mxu0 %v530
    %753 = vmatprep.subr.mxu0 0.0
    %754 = vmatpush2.msra.mxu0 %v529
    %755 = vmatprep.mubr.f32.mxu0 %v468
    %756 = vmatmul.mubr.f32.gmra.mxu0 %v467
    %v757 = vpop.f32.mrf.mxu0
    %v758 = vadd.f32 %v683, %v757
    %v759 = vpop.f32.mrf.mxu0
    %760 = vmatprep.mubr.f32.mxu0 %v476
    %761 = vmatmul.mubr.f32.gmra.mxu0 %v475
    %v762 = vpop.f32.mrf.mxu0
    %v763 = vadd.f32 %v688, %v762
    %v764 = vpop.f32.mrf.mxu0
    %765 = vdwg.mxu0
    %766 = vmatprep.subr.mxu0 0.0
    %767 = vmatpush1.msra.mxu0 %v560
    %768 = vmatprep.subr.mxu0 0.0
    %769 = vmatpush1.msra.mxu0 %v559
    %770 = vmatprep.subr.mxu0 0.0
    %771 = vmatpush1.msra.mxu0 %v558
    %772 = vmatprep.subr.mxu0 0.0
    %773 = vmatpush1.msra.mxu0 %v557
    %774 = vmatprep.subr.mxu0 0.0
    %775 = vmatpush1.msra.mxu0 %v556
    %776 = vmatprep.subr.mxu0 0.0
    %777 = vmatpush1.msra.mxu0 %v555
    %778 = vmatprep.subr.mxu0 0.0
    %779 = vmatpush1.msra.mxu0 %v554
    %780 = vmatprep.subr.mxu0 0.0
    %781 = vmatpush1.msra.mxu0 %v553
    %782 = vmatprep.subr.mxu0 0.0
    %783 = vmatpush1.msra.mxu0 %v552
    %784 = vmatprep.subr.mxu0 0.0
    %785 = vmatpush1.msra.mxu0 %v551
    %786 = vmatprep.subr.mxu0 0.0
    %787 = vmatpush1.msra.mxu0 %v550
    %788 = vmatprep.subr.mxu0 0.0
    %789 = vmatpush1.msra.mxu0 %v549
    %790 = vmatprep.subr.mxu0 0.0
    %791 = vmatpush1.msra.mxu0 %v548
    %792 = vmatprep.subr.mxu0 0.0
    %793 = vmatpush1.msra.mxu0 %v547
    %794 = vmatprep.subr.mxu0 0.0
    %795 = vmatpush1.msra.mxu0 %v546
    %796 = vmatprep.subr.mxu0 0.0
    %797 = vmatpush1.msra.mxu0 %v545
    %798 = vmatprep.subr.mxu0 0.0
    %799 = vmatpush2.msra.mxu0 %v576
    %800 = vmatprep.subr.mxu0 0.0
    %801 = vmatpush2.msra.mxu0 %v575
    %802 = vmatprep.subr.mxu0 0.0
    %803 = vmatpush2.msra.mxu0 %v574
    %804 = vmatprep.subr.mxu0 0.0
    %805 = vmatpush2.msra.mxu0 %v573
    %806 = vmatprep.subr.mxu0 0.0
    %807 = vmatpush2.msra.mxu0 %v572
    %808 = vmatprep.subr.mxu0 0.0
    %809 = vmatpush2.msra.mxu0 %v571
    %810 = vmatprep.subr.mxu0 0.0
    %811 = vmatpush2.msra.mxu0 %v570
    %812 = vmatprep.subr.mxu0 0.0
    %813 = vmatpush2.msra.mxu0 %v569
    %814 = vmatprep.subr.mxu0 0.0
    %815 = vmatpush2.msra.mxu0 %v568
    %816 = vmatprep.subr.mxu0 0.0
    %817 = vmatpush2.msra.mxu0 %v567
    %818 = vmatprep.subr.mxu0 0.0
    %819 = vmatpush2.msra.mxu0 %v566
    %820 = vmatprep.subr.mxu0 0.0
    %821 = vmatpush2.msra.mxu0 %v565
    %822 = vmatprep.subr.mxu0 0.0
    %823 = vmatpush2.msra.mxu0 %v564
    %824 = vmatprep.subr.mxu0 0.0
    %825 = vmatpush2.msra.mxu0 %v563
    %826 = vmatprep.subr.mxu0 0.0
    %827 = vmatpush2.msra.mxu0 %v562
    %828 = vmatprep.subr.mxu0 0.0
    %829 = vmatpush2.msra.mxu0 %v561
    %830 = vmatprep.mubr.f32.mxu0 %v470
    %831 = vmatmul.mubr.f32.gmra.mxu0 %v469
    %v832 = vpop.f32.mrf.mxu0
    %v833 = vadd.f32 %v758, %v832
    %v834 = vpop.f32.mrf.mxu0
    %835 = vmatprep.mubr.f32.mxu0 %v478
    %836 = vmatmul.mubr.f32.gmra.mxu0 %v477
    %v837 = vpop.f32.mrf.mxu0
    %v838 = vadd.f32 %v763, %v837
    %v839 = vpop.f32.mrf.mxu0
    %840 = vdwg.mxu0
    %841 = vmatprep.subr.mxu0 0.0
    %842 = vmatpush1.msra.mxu0 %v592
    %843 = vmatprep.subr.mxu0 0.0
    %844 = vmatpush1.msra.mxu0 %v591
    %845 = vmatprep.subr.mxu0 0.0
    %846 = vmatpush1.msra.mxu0 %v590
    %847 = vmatprep.subr.mxu0 0.0
    %848 = vmatpush1.msra.mxu0 %v589
    %849 = vmatprep.subr.mxu0 0.0
    %850 = vmatpush1.msra.mxu0 %v588
    %851 = vmatprep.subr.mxu0 0.0
    %852 = vmatpush1.msra.mxu0 %v587
    %853 = vmatprep.subr.mxu0 0.0
    %854 = vmatpush1.msra.mxu0 %v586
    %855 = vmatprep.subr.mxu0 0.0
    %856 = vmatpush1.msra.mxu0 %v585
    %857 = vmatprep.subr.mxu0 0.0
    %858 = vmatpush1.msra.mxu0 %v584
    %859 = vmatprep.subr.mxu0 0.0
    %860 = vmatpush1.msra.mxu0 %v583
    %861 = vmatprep.subr.mxu0 0.0
    %862 = vmatpush1.msra.mxu0 %v582
    %863 = vmatprep.subr.mxu0 0.0
    %864 = vmatpush1.msra.mxu0 %v581
    %865 = vmatprep.subr.mxu0 0.0
    %866 = vmatpush1.msra.mxu0 %v580
    %867 = vmatprep.subr.mxu0 0.0
    %868 = vmatpush1.msra.mxu0 %v579
    %869 = vmatprep.subr.mxu0 0.0
    %870 = vmatpush1.msra.mxu0 %v578
    %871 = vmatprep.subr.mxu0 0.0
    %872 = vmatpush1.msra.mxu0 %v577
    %873 = vmatprep.subr.mxu0 0.0
    %874 = vmatpush2.msra.mxu0 %v608
    %875 = vmatprep.subr.mxu0 0.0
    %876 = vmatpush2.msra.mxu0 %v607
    %877 = vmatprep.subr.mxu0 0.0
    %878 = vmatpush2.msra.mxu0 %v606
    %879 = vmatprep.subr.mxu0 0.0
    %880 = vmatpush2.msra.mxu0 %v605
    %881 = vmatprep.subr.mxu0 0.0
    %882 = vmatpush2.msra.mxu0 %v604
    %883 = vmatprep.subr.mxu0 0.0
    %884 = vmatpush2.msra.mxu0 %v603
    %885 = vmatprep.subr.mxu0 0.0
    %886 = vmatpush2.msra.mxu0 %v602
    %887 = vmatprep.subr.mxu0 0.0
    %888 = vmatpush2.msra.mxu0 %v601
    %889 = vmatprep.subr.mxu0 0.0
    %890 = vmatpush2.msra.mxu0 %v600
    %891 = vmatprep.subr.mxu0 0.0
    %892 = vmatpush2.msra.mxu0 %v599
    %893 = vmatprep.subr.mxu0 0.0
    %894 = vmatpush2.msra.mxu0 %v598
    %895 = vmatprep.subr.mxu0 0.0
    %896 = vmatpush2.msra.mxu0 %v597
    %897 = vmatprep.subr.mxu0 0.0
    %898 = vmatpush2.msra.mxu0 %v596
    %899 = vmatprep.subr.mxu0 0.0
    %900 = vmatpush2.msra.mxu0 %v595
    %901 = vmatprep.subr.mxu0 0.0
    %902 = vmatpush2.msra.mxu0 %v594
    %903 = vmatprep.subr.mxu0 0.0
    %904 = vmatpush2.msra.mxu0 %v593
    %905 = vmatprep.mubr.f32.mxu0 %v472
    %906 = vmatmul.mubr.f32.gmra.mxu0 %v471
    %v907 = vpop.f32.mrf.mxu0
    %v908 = vadd.f32 %v833, %v907
    %v909 = vpop.f32.mrf.mxu0
    %910 = vmatprep.mubr.f32.mxu0 %v480
    %911 = vmatmul.mubr.f32.gmra.mxu0 %v479
    %v912 = vpop.f32.mrf.mxu0
    %v913 = vadd.f32 %v838, %v912
    %v914 = vpop.f32.mrf.mxu0
    %915 = vdwg.mxu0
    %v916 = vmax.f32 %v908, 0.0
    %v917 = vmax.f32 %v913, 0.0
    %v918 = vmin.f32 %v916, 1.0
    %v919 = vmin.f32 %v917, 1.0
    %920 = vst [vmem:[#allocation10] sm:$0xff] %v918
    %921 = vst [vmem:[#allocation10 + $0x8] sm:$0xff] %v919
    // Predicated region
    $region38: #{tpu_custom_call.1} parent=1 // pred_check
      _
    $region39: #{tpu_custom_call.1} parent=1 // pred_check_branch
      %923 = sbr.rel (0) target = $region41
    $region40: #{tpu_custom_call.1} parent=1 // pred_region
      %s925 = ssub.s32 256, 256
      %926 = vsyncadd [#allocation4], %s925
      %s927 = sshll.u32 [#allocation10], 4
      %s928 = int_to_ptr.vmem [resolvable:$true] %s927
      %933 = dma.vmem_to_hbm [thread:$0]  %s928, 256, %s5, [#allocation4], 128, 128, 8
    $region41: #{tpu_custom_call.1} parent=1 // pred_fallthru
      _
    // Predicated region
    $region42: #{tpu_custom_call.1} parent=1 // pred_check
      _
    $region43: #{tpu_custom_call.1} parent=1 // pred_check_branch
      %935 = sbr.rel (0) target = $region45
    $region44: #{tpu_custom_call.1} parent=1 // pred_region
      %936 = dma.done [#allocation4], 256
    $region45: #{tpu_custom_call.1} parent=1 // pred_fallthru
      _
    %937 = vsyncpa [#allocation3], 1
    %938 = vsyncpa [#allocation6], 1
    %939 = vsyncpa [#allocation9], 1
    %940 = vsyncpa [#allocation4], 1

</llo_original>
